<compile_context>
chip_gen: v7x
topology: tpu7x:2x2x1
jax: 0.10.0
libtpu: 0.0.40
codegen_flags: <defaults>
</compile_context>

<pallas_src>
import functools

import jax
import jax.numpy as jnp
from jax.experimental import pallas as pl
from jax.experimental.pallas import tpu as pltpu


def _round_up(x, m):
    return ((x + m - 1) // m) * m


def _cdiv(a, b):
    return (a + b - 1) // b


def linear_kernel(x_ref, w_ref, b_ref, o_ref):
    # x_ref: (TB, Z), w_ref: (Z, Lp), b_ref: (1, Lp), o_ref: (TB, Lp)
    acc = jnp.dot(x_ref[...], w_ref[...], preferred_element_type=jnp.float32)
    # Bias add in f32 on the VPU (v5e has no bf16 VPU path), then cast once.
    o_ref[...] = (acc + b_ref[...]).astype(o_ref.dtype)


@functools.partial(jax.jit, static_argnames=("block_b",))
def out_softmax_forward(x, w_t, b, *, block_b=4096):
    """Linear layer: out = x @ w_t + b.

    x:   (B, Z) float32
    w_t: (Z, L) float32   (transposed torch weight, i.e. W_torch.T)
    b:   (L,)   float32
    returns (B, L) float32
    """
    B, Z = x.shape
    L = w_t.shape[1]

    # --- Output lane padding: only when it does not blow up HBM write traffic.
    LANE = 128
    Lp_full = _round_up(L, LANE)
    # Pad to a lane multiple only if that at most doubles the stored bytes.
    # For tiny L (e.g. 10 classes) the 12.8x write amplification of padding to
    # 128 far outweighs the masked-store penalty, so we keep L as-is.
    Lp = Lp_full if Lp_full <= 2 * L else L

    # --- Balanced batch tiles: bound padding waste to <8 rows per tile.
    n_tiles = max(1, _cdiv(B, block_b))
    TB = _round_up(_cdiv(B, n_tiles), 8)
    Bp = _round_up(B, TB)
    grid = (Bp // TB,)

    # --- Pad only when necessary (identity otherwise: no extra HBM copies).
    if Lp != L:
        w_p = jnp.zeros((Z, Lp), w_t.dtype).at[:, :L].set(w_t)
        b_p = jnp.zeros((1, Lp), b.dtype).at[0, :L].set(b)
    else:
        w_p = w_t
        b_p = b.reshape(1, L)
    x_p = x if Bp == B else jnp.pad(x, ((0, Bp - B), (0, 0)))

    out_p = pl.pallas_call(
        linear_kernel,
        out_shape=jax.ShapeDtypeStruct((Bp, Lp), x.dtype),
        grid_spec=pltpu.PrefetchScalarGridSpec(
            num_scalar_prefetch=0,
            grid=grid,
            in_specs=[
                # Activations stream per batch tile (double-buffered by Pallas).
                pl.BlockSpec((TB, Z), lambda i: (i, 0)),
                # Weight / bias: grid-invariant -> VMEM-resident across steps.
                pl.BlockSpec((Z, Lp), lambda i: (0, 0)),
                pl.BlockSpec((1, Lp), lambda i: (0, 0)),
            ],
            out_specs=pl.BlockSpec((TB, Lp), lambda i: (i, 0)),
        ),
        compiler_params=pltpu.CompilerParams(
            # Batch tiles are independent -> shard across TCs on v7x
            # (no-op on single-TC v5e/v6e).
            dimension_semantics=("parallel",),
            # Safe on every generation; far above what the tiles need here.
            vmem_limit_bytes=32 * 1024 * 1024,
        ),
        cost_estimate=pl.CostEstimate(
            flops=2 * Bp * Z * Lp,
            transcendentals=0,
            bytes_accessed=4 * (Bp * Z + Z * Lp + Lp + Bp * Lp),
        ),
    )(x_p, w_p, b_p)

    if Bp == B and Lp == L:
        return out_p
    return out_p[:B, :L]


if __name__ == "__main__":
    # Small shapes consistent with the module: z_dim=32 hidden, label_dim=10 classes.
    batch, z_dim, label_dim = 8, 32, 10

    key = jax.random.PRNGKey(0)
    kx, kw, kb = jax.random.split(key, 3)

    # Deterministic init mimicking nn.Linear uniform(-1/sqrt(z_dim), 1/sqrt(z_dim)).
    bound = 1.0 / (z_dim ** 0.5)
    w_torch = jax.random.uniform(kw, (label_dim, z_dim), jnp.float32, -bound, bound)
    b = jax.random.uniform(kb, (label_dim,), jnp.float32, -bound, bound)
    w_t = w_torch.T  # (z_dim, label_dim) so the kernel computes x @ W^T + b

    x = jax.random.normal(kx, (batch, z_dim), jnp.float32)

    out = out_softmax_forward(x, w_t, b)
    out = jax.block_until_ready(out)

    # Reference check in plain JAX.
    ref = x @ w_t + b
    assert out.shape == (batch, label_dim)
    assert jnp.allclose(out, ref, atol=1e-5, rtol=1e-5)

    print("KERNEL_OK")
</pallas_src>

<mosaic_0001>
module attributes {stable_mosaic.version = 11 : i64} {
  func.func @linear_kernel(%arg0: i32, %arg1: memref<8x32xf32, #tpu.memory_space<vmem>>, %arg2: memref<32x10xf32, #tpu.memory_space<vmem>>, %arg3: memref<1x10xf32, #tpu.memory_space<vmem>>, %arg4: memref<8x10xf32, #tpu.memory_space<vmem>>) attributes {dimension_semantics = [#tpu.dimension_semantics<parallel>], iteration_bounds = array<i64: 1>, scalar_prefetch = 0 : i64, scratch_operands = 0 : i64, tpu.core_type = #tpu.core_type<tc>, window_params = [{transform_indices = @transform_0, window_bounds = array<i64: 8, 32>}, {pipeline_mode = #tpu.pipeline_mode<synchronous>, transform_indices = @transform_1, window_bounds = array<i64: 32, 10>}, {pipeline_mode = #tpu.pipeline_mode<synchronous>, transform_indices = @transform_2, window_bounds = array<i64: 1, 10>}, {transform_indices = @transform_3, window_bounds = array<i64: 8, 10>}]} {
    %c0 = arith.constant 0 : index
    %c0_0 = arith.constant 0 : index
    %0 = vector.load %arg1[%c0, %c0_0] : memref<8x32xf32, #tpu.memory_space<vmem>>, vector<8x32xf32>
    %c0_1 = arith.constant 0 : index
    %c0_2 = arith.constant 0 : index
    %1 = vector.load %arg2[%c0_1, %c0_2] : memref<32x10xf32, #tpu.memory_space<vmem>>, vector<32x10xf32>
    %cst = arith.constant dense<0.000000e+00> : vector<8x10xf32>
    %2 = tpu.matmul %0, %1, %cst {dimension_numbers = #tpu.dot_dimension_numbers<[1], [0], [0], [1], [0, 0, 1, 1], [], []>} : vector<8x32xf32>, vector<32x10xf32>, vector<8x10xf32> -> vector<8x10xf32>
    %c0_3 = arith.constant 0 : index
    %c0_4 = arith.constant 0 : index
    %3 = vector.load %arg3[%c0_3, %c0_4] : memref<1x10xf32, #tpu.memory_space<vmem>>, vector<1x10xf32>
    %4 = vector.broadcast %3 : vector<1x10xf32> to vector<8x10xf32>
    %5 = arith.addf %2, %4 : vector<8x10xf32>
    %c0_5 = arith.constant 0 : index
    %c0_6 = arith.constant 0 : index
    %6 = vector.load %arg4[%c0_5, %c0_6] : memref<8x10xf32, #tpu.memory_space<vmem>>, vector<8x10xf32>
    tpu.vector_store %arg4[%c0_5, %c0_6], %5 {strides = array<i32>} : memref<8x10xf32, #tpu.memory_space<vmem>>, vector<8x10xf32>,
    return
  }
  func.func @transform_0(%arg0: i32) -> (i32, i32) {
    %c0_i32 = arith.constant 0 : i32
    %c0_i32_0 = arith.constant 0 : i32
    return %arg0, %c0_i32 : i32, i32
  }
  func.func @transform_1(%arg0: i32) -> (i32, i32) {
    %c0_i32 = arith.constant 0 : i32
    %c0_i32_0 = arith.constant 0 : i32
    %c0_i32_1 = arith.constant 0 : i32
    return %c0_i32, %c0_i32_0 : i32, i32
  }
  func.func @transform_2(%arg0: i32) -> (i32, i32) {
    %c0_i32 = arith.constant 0 : i32
    %c0_i32_0 = arith.constant 0 : i32
    %c0_i32_1 = arith.constant 0 : i32
    return %c0_i32, %c0_i32_0 : i32, i32
  }
  func.func @transform_3(%arg0: i32) -> (i32, i32) {
    %c0_i32 = arith.constant 0 : i32
    %c0_i32_0 = arith.constant 0 : i32
    return %arg0, %c0_i32 : i32, i32
  }
}

</mosaic_0001>

<llo_original>
// kernel: out_softmax_forward.1
$region0: #{out_softmax_forward.1}
  #allocation0 [shape = 'u32[]', space=smem, size = 0x4, offset = 0x4, fixed_abs, tag = 'smem constant byte address 0x4 - core index']
  #allocation1 [shape = 'u32[144,128]{1,0:T(1,128)}', space=vmem, size = 0x12000, scoped, tag = 'internal scratch']
  %s0 = inlined_call_operand.vmem [shape: f32[8,32], index: 0, kind: input, shape index: {}]
  %s1 = inlined_call_operand.vmem [shape: f32[32,10], index: 1, kind: input, shape index: {}]
  %s2 = inlined_call_operand.vmem [shape: f32[1,10], index: 2, kind: input, shape index: {}]
  %s3 = inlined_call_operand.hbm [shape: f32[8,10], index: 3, kind: output, shape index: {}]
  %s4 = sld [smem:[#allocation0]]
  $region22: #{out_softmax_forward.1} parent=0
    _
  %s6 = ssub.s32 1, %s4
  %s7 = scalar_select 0, %s6, %s4
  $region1: #{out_softmax_forward.1} parent=0
    #allocation2 [shape = 'u8[4096]{0}', space=vmem, size = 0x1000, scoped, tag = 'output window, operand 0, single buffered']
    #allocation3 [shape = 's32[1]{0}', space=sflag, size = 0x4, scoped, tag = 'scoped memory for out_softmax_forward.1']
    %8 = vsyncpa [#allocation3], 0
    // Predicated region
    $region2: #{out_softmax_forward.1} parent=1 // pred_check
      _
    $region3: #{out_softmax_forward.1} parent=1 // pred_check_branch
      %10 = sbr.rel (0) target = $region5
    $region4: #{out_softmax_forward.1} parent=1 // pred_region
      _
    $region5: #{out_softmax_forward.1} parent=1 // pred_fallthru
      _
    // Predicated region
    $region6: #{out_softmax_forward.1} parent=1 // pred_check
      _
    $region7: #{out_softmax_forward.1} parent=1 // pred_check_branch
      %12 = sbr.rel (0) target = $region9
    $region8: #{out_softmax_forward.1} parent=1 // pred_region
      _
    $region9: #{out_softmax_forward.1} parent=1 // pred_fallthru
      _
    // Predicated region
    $region10: #{out_softmax_forward.1} parent=1 // pred_check
      _
    $region11: #{out_softmax_forward.1} parent=1 // pred_check_branch
      %14 = sbr.rel (0) target = $region13
    $region12: #{out_softmax_forward.1} parent=1 // pred_region
      _
    $region13: #{out_softmax_forward.1} parent=1 // pred_fallthru
      _
    %v15 = vld [vmem:[%s0] sm:$0xff]
    %v16 = vld [vmem:[%s1] sm:$0xff]
    %v17 = vld [vmem:[%s1 + $0x8] sm:$0xff]
    %v18 = vld [vmem:[%s1 + $0x10] sm:$0xff]
    %v19 = vld [vmem:[%s1 + $0x18] sm:$0xff]
    %v20 = vld [vmem:[%s2] sm:$0x1]
    %v22 = vlaneseq
    %v23 = vshrl.u32 %v22, 7
    %v24 = vsub.s32 0, %v23
    %v25 = vrot.slane %v20, %v24
    %vm27 = vcmask 261120
    %v29 = vsel %vm27, %v15, 0
    %31 = vmatprep.subr.mxu0 0.0
    %32 = vmatpush1.msra.mxu0 %v16
    %33 = vmatprep.subr.mxu0 0.0
    %34 = vmatpush1.msra.mxu0 %v17
    %35 = vmatprep.subr.mxu0 0.0
    %36 = vmatpush1.msra.mxu0 %v18
    %37 = vmatprep.subr.mxu0 0.0
    %38 = vmatpush1.msra.mxu0 %v19
    %39 = vmatprep.subr.mxu0 0.0
    %40 = vmatpush1.msra.mxu0 0.0
    %41 = vmatprep.subr.mxu0 0.0
    %42 = vmatpush1.msra.mxu0 0.0
    %43 = vmatprep.subr.mxu0 0.0
    %44 = vmatpush1.msra.mxu0 0.0
    %45 = vmatprep.subr.mxu0 0.0
    %46 = vmatpush1.msra.mxu0 0.0
    %47 = vmatprep.subr.mxu0 0.0
    %48 = vmatpush1.msra.mxu0 0.0
    %49 = vmatprep.subr.mxu0 0.0
    %50 = vmatpush1.msra.mxu0 0.0
    %51 = vmatprep.subr.mxu0 0.0
    %52 = vmatpush1.msra.mxu0 0.0
    %53 = vmatprep.subr.mxu0 0.0
    %54 = vmatpush1.msra.mxu0 0.0
    %55 = vmatprep.subr.mxu0 0.0
    %56 = vmatpush1.msra.mxu0 0.0
    %57 = vmatprep.subr.mxu0 0.0
    %58 = vmatpush1.msra.mxu0 0.0
    %59 = vmatprep.subr.mxu0 0.0
    %60 = vmatpush1.msra.mxu0 0.0
    %61 = vmatprep.subr.mxu0 0.0
    %62 = vmatpush1.msra.mxu0 0.0
    %63 = vmatprep.subr.mxu0 0.0
    %64 = vmatpush1.msra.mxu0 0.0
    %65 = vmatprep.subr.mxu0 0.0
    %66 = vmatpush1.msra.mxu0 0.0
    %67 = vmatprep.subr.mxu0 0.0
    %68 = vmatpush1.msra.mxu0 0.0
    %69 = vmatprep.subr.mxu0 0.0
    %70 = vmatpush1.msra.mxu0 0.0
    %71 = vmatprep.subr.mxu0 0.0
    %72 = vmatpush1.msra.mxu0 0.0
    %73 = vmatprep.subr.mxu0 0.0
    %74 = vmatpush1.msra.mxu0 0.0
    %75 = vmatprep.subr.mxu0 0.0
    %76 = vmatpush1.msra.mxu0 0.0
    %77 = vmatprep.subr.mxu0 0.0
    %78 = vmatpush1.msra.mxu0 0.0
    %79 = vmatprep.subr.mxu0 0.0
    %80 = vmatpush1.msra.mxu0 0.0
    %81 = vmatprep.subr.mxu0 0.0
    %82 = vmatpush1.msra.mxu0 0.0
    %83 = vmatprep.subr.mxu0 0.0
    %84 = vmatpush1.msra.mxu0 0.0
    %85 = vmatprep.subr.mxu0 0.0
    %86 = vmatpush1.msra.mxu0 0.0
    %87 = vmatprep.subr.mxu0 0.0
    %88 = vmatpush1.msra.mxu0 0.0
    %89 = vmatprep.subr.mxu0 0.0
    %90 = vmatpush1.msra.mxu0 0.0
    %91 = vmatprep.subr.mxu0 0.0
    %92 = vmatpush1.msra.mxu0 0.0
    %93 = vmatprep.subr.mxu0 0.0
    %94 = vmatpush1.msra.mxu0 0.0
    %95 = vmatprep.mubr.f32.mxu0 0.0
    %96 = vmatmul.mubr.f32.gmra.mrb[0].mxu0 %v29
    %v97 = vpop.f32.mrb[0].mxu0
    %v98 = vadd.f32 %v25, %v97
    %v99 = vpop.f32.mrb[0].mxu0
    %100 = vdwg.mxu0
    %vm101 = vcmask 80896
    %102 = vst.msk [vmem:[#allocation2] sm:$0xff] %vm101, %v98
    // Predicated region
    $region14: #{out_softmax_forward.1} parent=1 // pred_check
      _
    $region15: #{out_softmax_forward.1} parent=1 // pred_check_branch
      %104 = sbr.rel (0) target = $region17
    $region16: #{out_softmax_forward.1} parent=1 // pred_region
      %s106 = ssub.s32 128, 128
      %107 = vsyncadd [#allocation3], %s106
      %s109 = sshll.u32 [#allocation2], 4
      %s110 = int_to_ptr.vmem [resolvable:$true] %s109
      %112 = dma.vmem_to_hbm [thread:$0]  %s110, 128, %s3, [#allocation3]
    $region17: #{out_softmax_forward.1} parent=1 // pred_fallthru
      _
    // Predicated region
    $region18: #{out_softmax_forward.1} parent=1 // pred_check
      _
    $region19: #{out_softmax_forward.1} parent=1 // pred_check_branch
      %114 = sbr.rel (0) target = $region21
    $region20: #{out_softmax_forward.1} parent=1 // pred_region
      %115 = dma.done [#allocation3], 128
    $region21: #{out_softmax_forward.1} parent=1 // pred_fallthru
      _
    %116 = vsyncpa [#allocation3], 1

</llo_original>
